<compile_context>
chip_gen: v6e
topology: v6e:2x2x1
jax: 0.10.0
libtpu: 0.0.40
codegen_flags: <defaults>
</compile_context>

<pallas_src>
import functools

import jax
import jax.numpy as jnp
from jax.experimental import pallas as pl
from jax.experimental.pallas import tpu as pltpu


def _round_up(x: int, m: int) -> int:
    return (x + m - 1) // m * m


def _mlp_kernel(x_ref, w1_ref, b1_ref, w2_ref, b2_ref, o_ref):
    # linear1: (TB, D_in) @ (D_in, H) on the MXU, f32 accumulation.
    h = jnp.dot(x_ref[...], w1_ref[...], preferred_element_type=jnp.float32)
    # bias + ReLU in f32 on the VPU.
    h = jnp.maximum(h + b1_ref[...], 0.0)
    # linear2: (TB, H) @ (H, D_out); cast activations back to the MXU dtype.
    out = jnp.dot(h.astype(w2_ref.dtype), w2_ref[...],
                  preferred_element_type=jnp.float32)
    o_ref[...] = (out + b2_ref[...]).astype(o_ref.dtype)


@functools.partial(jax.jit, static_argnames=("block_b", "matmul_dtype"))
def net_relu_forward(x, w1, b1, w2, b2, *, block_b=256,
                     matmul_dtype=jnp.bfloat16):
    """Fused NetRelu forward.

    x:  (B, D_in) float32
    w1: (D_in, H) float32    (torch linear1.weight.T)
    b1: (1, H)    float32
    w2: (H, D_out) float32   (torch linear2.weight.T)
    b2: (1, D_out) float32
    returns (B, D_out) float32
    """
    B, D_in = x.shape
    H = w1.shape[1]
    D_out = w2.shape[1]
    out_dtype = x.dtype

    # Lane-dense padding: contracting / output feature dims to multiples of 128.
    d_in_p = _round_up(D_in, 128)
    h_p = _round_up(H, 128)
    d_out_p = _round_up(D_out, 128)

    # Batch tile: multiple of 8 sublanes, capped at block_b (MXU-friendly).
    tb = min(block_b, _round_up(B, 8))
    b_p = _round_up(B, tb)

    # Zero-pad (zeros are inert through both matmuls and ReLU) and cast the
    # matmul operands to the MXU dtype; biases stay f32 for the f32 epilogue.
    xm = jnp.pad(x.astype(matmul_dtype), ((0, b_p - B), (0, d_in_p - D_in)))
    w1m = jnp.pad(w1.astype(matmul_dtype), ((0, d_in_p - D_in), (0, h_p - H)))
    w2m = jnp.pad(w2.astype(matmul_dtype), ((0, h_p - H), (0, d_out_p - D_out)))
    b1p = jnp.pad(b1.astype(jnp.float32), ((0, 0), (0, h_p - H)))
    b2p = jnp.pad(b2.astype(jnp.float32), ((0, 0), (0, d_out_p - D_out)))

    grid = (b_p // tb,)

    msize = jnp.dtype(matmul_dtype).itemsize
    # Double-buffered x/out tiles + VMEM-resident weights/biases, with headroom,
    # capped well below v7x's 64 MiB physical VMEM.
    footprint = (2 * tb * d_in_p * msize
                 + 2 * tb * d_out_p * 4
                 + d_in_p * h_p * msize
                 + h_p * d_out_p * msize
                 + (h_p + d_out_p) * 4)
    vmem_limit = int(min(48 << 20, max(2 * footprint, 8 << 20)))

    bytes_accessed = (xm.size * msize + w1m.size * msize + w2m.size * msize
                      + b1p.size * 4 + b2p.size * 4 + b_p * d_out_p * 4)
    cost = pl.CostEstimate(
        flops=2 * b_p * (d_in_p * h_p + h_p * d_out_p),
        transcendentals=0,
        bytes_accessed=int(bytes_accessed),
    )

    out_padded = pl.pallas_call(
        _mlp_kernel,
        out_shape=jax.ShapeDtypeStruct((b_p, d_out_p), out_dtype),
        grid=grid,
        in_specs=[
            pl.BlockSpec((tb, d_in_p), lambda i: (i, 0)),     # x tile (pipelined)
            pl.BlockSpec((d_in_p, h_p), lambda i: (0, 0)),    # W1 (VMEM-resident)
            pl.BlockSpec((1, h_p), lambda i: (0, 0)),         # b1 (VMEM-resident)
            pl.BlockSpec((h_p, d_out_p), lambda i: (0, 0)),   # W2 (VMEM-resident)
            pl.BlockSpec((1, d_out_p), lambda i: (0, 0)),     # b2 (VMEM-resident)
        ],
        out_specs=pl.BlockSpec((tb, d_out_p), lambda i: (i, 0)),
        compiler_params=pltpu.CompilerParams(
            dimension_semantics=("parallel",),
            vmem_limit_bytes=vmem_limit,
        ),
        cost_estimate=cost,
    )(xm, w1m, b1p, w2m, b2p)

    # Slice padded batch rows / output lanes back to the logical shape.
    return out_padded[:B, :D_out]


def init_params(key, d_in, h, d_out):
    """Deterministic init mimicking torch.nn.Linear default (U[-1/sqrt(fan_in), +])."""
    k1, k2, k3, k4 = jax.random.split(key, 4)
    bound1 = 1.0 / jnp.sqrt(d_in)
    bound2 = 1.0 / jnp.sqrt(h)
    w1 = jax.random.uniform(k1, (d_in, h), jnp.float32, -bound1, bound1)
    b1 = jax.random.uniform(k2, (1, h), jnp.float32, -bound1, bound1)
    w2 = jax.random.uniform(k3, (h, d_out), jnp.float32, -bound2, bound2)
    b2 = jax.random.uniform(k4, (1, d_out), jnp.float32, -bound2, bound2)
    return w1, b1, w2, b2


if __name__ == "__main__":
    # Real MNIST MLP shapes from the course script: 784 -> 100 -> 10.
    B, D_in, H, D_out = 32, 784, 100, 10

    key = jax.random.PRNGKey(0)
    kx, kp = jax.random.split(key)
    x = jax.random.normal(kx, (B, D_in), jnp.float32)
    w1, b1, w2, b2 = init_params(kp, D_in, H, D_out)

    out = net_relu_forward(x, w1, b1, w2, b2)
    jax.block_until_ready(out)
    assert out.shape == (B, D_out)

    # Reference using the same bf16-matmul / f32-accumulate recipe as the kernel.
    h_ref = jnp.dot(x.astype(jnp.bfloat16), w1.astype(jnp.bfloat16),
                    preferred_element_type=jnp.float32) + b1
    h_ref = jnp.maximum(h_ref, 0.0)
    ref = jnp.dot(h_ref.astype(jnp.bfloat16), w2.astype(jnp.bfloat16),
                  preferred_element_type=jnp.float32) + b2
    assert jnp.allclose(out, ref, atol=1e-3, rtol=1e-3)

    # Loose sanity check against the full-f32 torch-equivalent forward.
    ref_f32 = jnp.maximum(x @ w1 + b1, 0.0) @ w2 + b2
    assert jnp.allclose(out, ref_f32, atol=5e-2, rtol=5e-2)

    print("KERNEL_OK")
</pallas_src>

<mosaic_0001>
module attributes {stable_mosaic.version = 11 : i64} {
  func.func @_mlp_kernel(%arg0: i32, %arg1: memref<32x896xbf16, #tpu.memory_space<vmem>>, %arg2: memref<896x128xbf16, #tpu.memory_space<vmem>>, %arg3: memref<1x128xf32, #tpu.memory_space<vmem>>, %arg4: memref<128x128xbf16, #tpu.memory_space<vmem>>, %arg5: memref<1x128xf32, #tpu.memory_space<vmem>>, %arg6: memref<32x128xf32, #tpu.memory_space<vmem>>) attributes {dimension_semantics = [#tpu.dimension_semantics<parallel>], iteration_bounds = array<i64: 1>, scalar_prefetch = 0 : i64, scratch_operands = 0 : i64, tpu.core_type = #tpu.core_type<tc>, window_params = [{transform_indices = @transform_0, window_bounds = array<i64: 32, 896>}, {pipeline_mode = #tpu.pipeline_mode<synchronous>, transform_indices = @transform_1, window_bounds = array<i64: 896, 128>}, {pipeline_mode = #tpu.pipeline_mode<synchronous>, transform_indices = @transform_2, window_bounds = array<i64: 1, 128>}, {pipeline_mode = #tpu.pipeline_mode<synchronous>, transform_indices = @transform_3, window_bounds = array<i64: 128, 128>}, {pipeline_mode = #tpu.pipeline_mode<synchronous>, transform_indices = @transform_4, window_bounds = array<i64: 1, 128>}, {transform_indices = @transform_5, window_bounds = array<i64: 32, 128>}]} {
    %c0 = arith.constant 0 : index
    %c0_0 = arith.constant 0 : index
    %0 = vector.load %arg1[%c0, %c0_0] : memref<32x896xbf16, #tpu.memory_space<vmem>>, vector<32x896xbf16>
    %c0_1 = arith.constant 0 : index
    %c0_2 = arith.constant 0 : index
    %1 = vector.load %arg2[%c0_1, %c0_2] : memref<896x128xbf16, #tpu.memory_space<vmem>>, vector<896x128xbf16>
    %cst = arith.constant dense<0.000000e+00> : vector<32x128xf32>
    %2 = tpu.matmul %0, %1, %cst {dimension_numbers = #tpu.dot_dimension_numbers<[1], [0], [0], [1], [0, 0, 1, 1], [], []>} : vector<32x896xbf16>, vector<896x128xbf16>, vector<32x128xf32> -> vector<32x128xf32>
    %c0_3 = arith.constant 0 : index
    %c0_4 = arith.constant 0 : index
    %3 = vector.load %arg3[%c0_3, %c0_4] : memref<1x128xf32, #tpu.memory_space<vmem>>, vector<1x128xf32>
    %4 = vector.broadcast %3 : vector<1x128xf32> to vector<32x128xf32>
    %5 = arith.addf %2, %4 : vector<32x128xf32>
    %cst_5 = arith.constant 0.000000e+00 : f32
    %6 = vector.broadcast %cst_5 : f32 to vector<32x128xf32>
    %7 = arith.maximumf %5, %6 : vector<32x128xf32>
    %8 = arith.truncf %7 : vector<32x128xf32> to vector<32x128xbf16>
    %c0_6 = arith.constant 0 : index
    %c0_7 = arith.constant 0 : index
    %9 = vector.load %arg4[%c0_6, %c0_7] : memref<128x128xbf16, #tpu.memory_space<vmem>>, vector<128x128xbf16>
    %cst_8 = arith.constant dense<0.000000e+00> : vector<32x128xf32>
    %10 = tpu.matmul %8, %9, %cst_8 {dimension_numbers = #tpu.dot_dimension_numbers<[1], [0], [0], [1], [0, 0, 1, 1], [], []>} : vector<32x128xbf16>, vector<128x128xbf16>, vector<32x128xf32> -> vector<32x128xf32>
    %c0_9 = arith.constant 0 : index
    %c0_10 = arith.constant 0 : index
    %11 = vector.load %arg5[%c0_9, %c0_10] : memref<1x128xf32, #tpu.memory_space<vmem>>, vector<1x128xf32>
    %12 = vector.broadcast %11 : vector<1x128xf32> to vector<32x128xf32>
    %13 = arith.addf %10, %12 : vector<32x128xf32>
    %c0_11 = arith.constant 0 : index
    %c0_12 = arith.constant 0 : index
    %14 = vector.load %arg6[%c0_11, %c0_12] : memref<32x128xf32, #tpu.memory_space<vmem>>, vector<32x128xf32>
    tpu.vector_store %arg6[%c0_11, %c0_12], %13 {strides = array<i32>} : memref<32x128xf32, #tpu.memory_space<vmem>>, vector<32x128xf32>,
    return
  }
  func.func @transform_0(%arg0: i32) -> (i32, i32) {
    %c0_i32 = arith.constant 0 : i32
    %c0_i32_0 = arith.constant 0 : i32
    return %arg0, %c0_i32 : i32, i32
  }
  func.func @transform_1(%arg0: i32) -> (i32, i32) {
    %c0_i32 = arith.constant 0 : i32
    %c0_i32_0 = arith.constant 0 : i32
    %c0_i32_1 = arith.constant 0 : i32
    return %c0_i32, %c0_i32_0 : i32, i32
  }
  func.func @transform_2(%arg0: i32) -> (i32, i32) {
    %c0_i32 = arith.constant 0 : i32
    %c0_i32_0 = arith.constant 0 : i32
    %c0_i32_1 = arith.constant 0 : i32
    return %c0_i32, %c0_i32_0 : i32, i32
  }
  func.func @transform_3(%arg0: i32) -> (i32, i32) {
    %c0_i32 = arith.constant 0 : i32
    %c0_i32_0 = arith.constant 0 : i32
    %c0_i32_1 = arith.constant 0 : i32
    return %c0_i32, %c0_i32_0 : i32, i32
  }
  func.func @transform_4(%arg0: i32) -> (i32, i32) {
    %c0_i32 = arith.constant 0 : i32
    %c0_i32_0 = arith.constant 0 : i32
    %c0_i32_1 = arith.constant 0 : i32
    return %c0_i32, %c0_i32_0 : i32, i32
  }
  func.func @transform_5(%arg0: i32) -> (i32, i32) {
    %c0_i32 = arith.constant 0 : i32
    %c0_i32_0 = arith.constant 0 : i32
    return %arg0, %c0_i32 : i32, i32
  }
}

</mosaic_0001>

<llo_original>
// kernel: net_relu_forward.1
$region0: #{net_relu_forward.1}
  #allocation0 [shape = 'u32[]', space=smem, size = 0x4, offset = 0x4, fixed_abs, tag = 'smem constant byte address 0x4 - core index']
  #allocation1 [shape = 'u32[144,128]{1,0:T(1,128)}', space=vmem, size = 0x12000, scoped, tag = 'internal scratch']
  %s0 = inlined_call_operand.vmem [shape: bf16[32,896], index: 0, kind: input, shape index: {}]
  %s1 = inlined_call_operand.vmem [shape: bf16[896,128], index: 1, kind: input, shape index: {}]
  %s2 = inlined_call_operand.vmem [shape: f32[1,128], index: 2, kind: input, shape index: {}]
  %s3 = inlined_call_operand.vmem [shape: bf16[128,128], index: 3, kind: input, shape index: {}]
  %s4 = inlined_call_operand.vmem [shape: f32[1,128], index: 4, kind: input, shape index: {}]
  %s5 = inlined_call_operand.vmem [shape: f32[32,128], index: 5, kind: output, shape index: {}]
  %s6 = sld [smem:[#allocation0]]
  $region30: #{net_relu_forward.1} parent=0
    _
  %s8 = ssub.s32 1, %s6
  %s9 = scalar_select 0, %s8, %s6
  // Predicated region
  $region2: #{net_relu_forward.1} parent=0 // pred_check
    _
  $region3: #{net_relu_forward.1} parent=0 // pred_check_branch
    %11 = sbr.rel (0) target = $region5
  $region4: #{net_relu_forward.1} parent=0 // pred_region
    _
  $region5: #{net_relu_forward.1} parent=0 // pred_fallthru
    _
  // Predicated region
  $region6: #{net_relu_forward.1} parent=0 // pred_check
    _
  $region7: #{net_relu_forward.1} parent=0 // pred_check_branch
    %13 = sbr.rel (0) target = $region9
  $region8: #{net_relu_forward.1} parent=0 // pred_region
    _
  $region9: #{net_relu_forward.1} parent=0 // pred_fallthru
    _
  // Predicated region
  $region10: #{net_relu_forward.1} parent=0 // pred_check
    _
  $region11: #{net_relu_forward.1} parent=0 // pred_check_branch
    %15 = sbr.rel (0) target = $region13
  $region12: #{net_relu_forward.1} parent=0 // pred_region
    _
  $region13: #{net_relu_forward.1} parent=0 // pred_fallthru
    _
  // Predicated region
  $region14: #{net_relu_forward.1} parent=0 // pred_check
    _
  $region15: #{net_relu_forward.1} parent=0 // pred_check_branch
    %17 = sbr.rel (0) target = $region17
  $region16: #{net_relu_forward.1} parent=0 // pred_region
    _
  $region17: #{net_relu_forward.1} parent=0 // pred_fallthru
    _
  // Predicated region
  $region18: #{net_relu_forward.1} parent=0 // pred_check
    _
  $region19: #{net_relu_forward.1} parent=0 // pred_check_branch
    %19 = sbr.rel (0) target = $region21
  $region20: #{net_relu_forward.1} parent=0 // pred_region
    _
  $region21: #{net_relu_forward.1} parent=0 // pred_fallthru
    _
  %v21 = vld [vmem:[%s0] sm:$0xff]
  %v22 = vld [vmem:[%s0 + $0x8] sm:$0xff]
  %v23 = vld [vmem:[%s0 + $0x10] sm:$0xff]
  %v24 = vld [vmem:[%s0 + $0x18] sm:$0xf]
  %v25 = vld [vmem:[%s0 + $0x1c] sm:$0xff]
  %v26 = vld [vmem:[%s0 + $0x24] sm:$0xff]
  %v27 = vld [vmem:[%s0 + $0x2c] sm:$0xff]
  %v28 = vld [vmem:[%s0 + $0x34] sm:$0xf]
  %v29 = vld [vmem:[%s0 + $0x38] sm:$0xff]
  %v30 = vld [vmem:[%s0 + $0x40] sm:$0xff]
  %v31 = vld [vmem:[%s0 + $0x48] sm:$0xff]
  %v32 = vld [vmem:[%s0 + $0x50] sm:$0xf]
  %v33 = vld [vmem:[%s0 + $0x54] sm:$0xff]
  %v34 = vld [vmem:[%s0 + $0x5c] sm:$0xff]
  %v35 = vld [vmem:[%s0 + $0x64] sm:$0xff]
  %v36 = vld [vmem:[%s0 + $0x6c] sm:$0xf]
  %v37 = vld [vmem:[%s1] sm:$0xf]
  %v38 = vld [vmem:[%s1 + $0x4] sm:$0xf]
  %v39 = vld [vmem:[%s1 + $0x8] sm:$0xf]
  %v40 = vld [vmem:[%s1 + $0xc] sm:$0xf]
  %v41 = vld [vmem:[%s1 + $0x10] sm:$0xf]
  %v42 = vld [vmem:[%s1 + $0x14] sm:$0xf]
  %v43 = vld [vmem:[%s1 + $0x18] sm:$0xf]
  %v44 = vld [vmem:[%s1 + $0x1c] sm:$0xf]
  %v45 = vld [vmem:[%s1 + $0x20] sm:$0xf]
  %v46 = vld [vmem:[%s1 + $0x24] sm:$0xf]
  %v47 = vld [vmem:[%s1 + $0x28] sm:$0xf]
  %v48 = vld [vmem:[%s1 + $0x2c] sm:$0xf]
  %v49 = vld [vmem:[%s1 + $0x30] sm:$0xf]
  %v50 = vld [vmem:[%s1 + $0x34] sm:$0xf]
  %v51 = vld [vmem:[%s1 + $0x38] sm:$0xf]
  %v52 = vld [vmem:[%s1 + $0x3c] sm:$0xf]
  %v53 = vld [vmem:[%s1 + $0x40] sm:$0xf]
  %v54 = vld [vmem:[%s1 + $0x44] sm:$0xf]
  %v55 = vld [vmem:[%s1 + $0x48] sm:$0xf]
  %v56 = vld [vmem:[%s1 + $0x4c] sm:$0xf]
  %v57 = vld [vmem:[%s1 + $0x50] sm:$0xf]
  %v58 = vld [vmem:[%s1 + $0x54] sm:$0xf]
  %v59 = vld [vmem:[%s1 + $0x58] sm:$0xf]
  %v60 = vld [vmem:[%s1 + $0x5c] sm:$0xf]
  %v61 = vld [vmem:[%s1 + $0x60] sm:$0xf]
  %v62 = vld [vmem:[%s1 + $0x64] sm:$0xf]
  %v63 = vld [vmem:[%s1 + $0x68] sm:$0xf]
  %v64 = vld [vmem:[%s1 + $0x6c] sm:$0xf]
  %v65 = vld [vmem:[%s1 + $0x70] sm:$0xf]
  %v66 = vld [vmem:[%s1 + $0x74] sm:$0xf]
  %v67 = vld [vmem:[%s1 + $0x78] sm:$0xf]
  %v68 = vld [vmem:[%s1 + $0x7c] sm:$0xf]
  %v69 = vld [vmem:[%s1 + $0x80] sm:$0xf]
  %v70 = vld [vmem:[%s1 + $0x84] sm:$0xf]
  %v71 = vld [vmem:[%s1 + $0x88] sm:$0xf]
  %v72 = vld [vmem:[%s1 + $0x8c] sm:$0xf]
  %v73 = vld [vmem:[%s1 + $0x90] sm:$0xf]
  %v74 = vld [vmem:[%s1 + $0x94] sm:$0xf]
  %v75 = vld [vmem:[%s1 + $0x98] sm:$0xf]
  %v76 = vld [vmem:[%s1 + $0x9c] sm:$0xf]
  %v77 = vld [vmem:[%s1 + $0xa0] sm:$0xf]
  %v78 = vld [vmem:[%s1 + $0xa4] sm:$0xf]
  %v79 = vld [vmem:[%s1 + $0xa8] sm:$0xf]
  %v80 = vld [vmem:[%s1 + $0xac] sm:$0xf]
  %v81 = vld [vmem:[%s1 + $0xb0] sm:$0xf]
  %v82 = vld [vmem:[%s1 + $0xb4] sm:$0xf]
  %v83 = vld [vmem:[%s1 + $0xb8] sm:$0xf]
  %v84 = vld [vmem:[%s1 + $0xbc] sm:$0xf]
  %v85 = vld [vmem:[%s1 + $0xc0] sm:$0xf]
  %v86 = vld [vmem:[%s1 + $0xc4] sm:$0xf]
  %v87 = vld [vmem:[%s1 + $0xc8] sm:$0xf]
  %v88 = vld [vmem:[%s1 + $0xcc] sm:$0xf]
  %v89 = vld [vmem:[%s1 + $0xd0] sm:$0xf]
  %v90 = vld [vmem:[%s1 + $0xd4] sm:$0xf]
  %v91 = vld [vmem:[%s1 + $0xd8] sm:$0xf]
  %v92 = vld [vmem:[%s1 + $0xdc] sm:$0xf]
  %v93 = vld [vmem:[%s1 + $0xe0] sm:$0xf]
  %v94 = vld [vmem:[%s1 + $0xe4] sm:$0xf]
  %v95 = vld [vmem:[%s1 + $0xe8] sm:$0xf]
  %v96 = vld [vmem:[%s1 + $0xec] sm:$0xf]
  %v97 = vld [vmem:[%s1 + $0xf0] sm:$0xf]
  %v98 = vld [vmem:[%s1 + $0xf4] sm:$0xf]
  %v99 = vld [vmem:[%s1 + $0xf8] sm:$0xf]
  %v100 = vld [vmem:[%s1 + $0xfc] sm:$0xf]
  %v101 = vld [vmem:[%s1 + $0x100] sm:$0xf]
  %v102 = vld [vmem:[%s1 + $0x104] sm:$0xf]
  %v103 = vld [vmem:[%s1 + $0x108] sm:$0xf]
  %v104 = vld [vmem:[%s1 + $0x10c] sm:$0xf]
  %v105 = vld [vmem:[%s1 + $0x110] sm:$0xf]
  %v106 = vld [vmem:[%s1 + $0x114] sm:$0xf]
  %v107 = vld [vmem:[%s1 + $0x118] sm:$0xf]
  %v108 = vld [vmem:[%s1 + $0x11c] sm:$0xf]
  %v109 = vld [vmem:[%s1 + $0x120] sm:$0xf]
  %v110 = vld [vmem:[%s1 + $0x124] sm:$0xf]
  %v111 = vld [vmem:[%s1 + $0x128] sm:$0xf]
  %v112 = vld [vmem:[%s1 + $0x12c] sm:$0xf]
  %v113 = vld [vmem:[%s1 + $0x130] sm:$0xf]
  %v114 = vld [vmem:[%s1 + $0x134] sm:$0xf]
  %v115 = vld [vmem:[%s1 + $0x138] sm:$0xf]
  %v116 = vld [vmem:[%s1 + $0x13c] sm:$0xf]
  %v117 = vld [vmem:[%s1 + $0x140] sm:$0xf]
  %v118 = vld [vmem:[%s1 + $0x144] sm:$0xf]
  %v119 = vld [vmem:[%s1 + $0x148] sm:$0xf]
  %v120 = vld [vmem:[%s1 + $0x14c] sm:$0xf]
  %v121 = vld [vmem:[%s1 + $0x150] sm:$0xf]
  %v122 = vld [vmem:[%s1 + $0x154] sm:$0xf]
  %v123 = vld [vmem:[%s1 + $0x158] sm:$0xf]
  %v124 = vld [vmem:[%s1 + $0x15c] sm:$0xf]
  %v125 = vld [vmem:[%s1 + $0x160] sm:$0xf]
  %v126 = vld [vmem:[%s1 + $0x164] sm:$0xf]
  %v127 = vld [vmem:[%s1 + $0x168] sm:$0xf]
  %v128 = vld [vmem:[%s1 + $0x16c] sm:$0xf]
  %v129 = vld [vmem:[%s1 + $0x170] sm:$0xf]
  %v130 = vld [vmem:[%s1 + $0x174] sm:$0xf]
  %v131 = vld [vmem:[%s1 + $0x178] sm:$0xf]
  %v132 = vld [vmem:[%s1 + $0x17c] sm:$0xf]
  %v133 = vld [vmem:[%s1 + $0x180] sm:$0xf]
  %v134 = vld [vmem:[%s1 + $0x184] sm:$0xf]
  %v135 = vld [vmem:[%s1 + $0x188] sm:$0xf]
  %v136 = vld [vmem:[%s1 + $0x18c] sm:$0xf]
  %v137 = vld [vmem:[%s1 + $0x190] sm:$0xf]
  %v138 = vld [vmem:[%s1 + $0x194] sm:$0xf]
  %v139 = vld [vmem:[%s1 + $0x198] sm:$0xf]
  %v140 = vld [vmem:[%s1 + $0x19c] sm:$0xf]
  %v141 = vld [vmem:[%s1 + $0x1a0] sm:$0xf]
  %v142 = vld [vmem:[%s1 + $0x1a4] sm:$0xf]
  %v143 = vld [vmem:[%s1 + $0x1a8] sm:$0xf]
  %v144 = vld [vmem:[%s1 + $0x1ac] sm:$0xf]
  %v145 = vld [vmem:[%s1 + $0x1b0] sm:$0xf]
  %v146 = vld [vmem:[%s1 + $0x1b4] sm:$0xf]
  %v147 = vld [vmem:[%s1 + $0x1b8] sm:$0xf]
  %v148 = vld [vmem:[%s1 + $0x1bc] sm:$0xf]
  %v149 = vld [vmem:[%s2] sm:$0x1]
  %v151 = vlaneseq
  %v152 = vshrl.u32 %v151, 7
  %v153 = vsub.s32 0, %v152
  %v154 = vrot.slane %v149, %v153
  %v172 = vunpack.c.l.b16 %v21
  %v173 = vunpack.c.h.b16 %v21
  %v174 = vunpack.c.l.b16 %v22
  %v175 = vunpack.c.h.b16 %v22
  %v176 = vunpack.c.l.b16 %v23
  %v177 = vunpack.c.h.b16 %v23
  %v178 = vunpack.c.l.b16 %v24
  %v179 = vunpack.c.l.b16 %v25
  %v180 = vunpack.c.h.b16 %v25
  %v181 = vunpack.c.l.b16 %v26
  %v182 = vunpack.c.h.b16 %v26
  %v183 = vunpack.c.l.b16 %v27
  %v184 = vunpack.c.h.b16 %v27
  %v185 = vunpack.c.l.b16 %v28
  %v186 = vunpack.c.l.b16 %v29
  %v187 = vunpack.c.h.b16 %v29
  %v188 = vunpack.c.l.b16 %v30
  %v189 = vunpack.c.h.b16 %v30
  %v190 = vunpack.c.l.b16 %v31
  %v191 = vunpack.c.h.b16 %v31
  %v192 = vunpack.c.l.b16 %v32
  %v193 = vunpack.c.l.b16 %v33
  %v194 = vunpack.c.h.b16 %v33
  %v195 = vunpack.c.l.b16 %v34
  %v196 = vunpack.c.h.b16 %v34
  %v197 = vunpack.c.l.b16 %v35
  %v198 = vunpack.c.h.b16 %v35
  %v199 = vunpack.c.l.b16 %v36
  %v200 = vpack.c.b16 %v179, %v172
  %v201 = vpack.c.b16 %v180, %v173
  %v202 = vpack.c.b16 %v181, %v174
  %v203 = vpack.c.b16 %v182, %v175
  %v204 = vpack.c.b16 %v183, %v176
  %v205 = vpack.c.b16 %v184, %v177
  %v206 = vpack.c.b16 %v185, %v178
  %v207 = vpack.c.b16 %v193, %v186
  %v208 = vpack.c.b16 %v194, %v187
  %v209 = vpack.c.b16 %v195, %v188
  %v210 = vpack.c.b16 %v196, %v189
  %v211 = vpack.c.b16 %v197, %v190
  %v212 = vpack.c.b16 %v198, %v191
  %v213 = vpack.c.b16 %v199, %v192
  %v340 = vunpack.c.l.b16 %v37
  %v341 = vunpack.c.l.b16 %v38
  %v342 = vunpack.c.l.b16 %v39
  %v343 = vunpack.c.l.b16 %v40
  %v344 = vunpack.c.l.b16 %v41
  %v345 = vunpack.c.l.b16 %v42
  %v346 = vunpack.c.l.b16 %v43
  %v347 = vunpack.c.l.b16 %v44
  %v348 = vunpack.c.l.b16 %v45
  %v349 = vunpack.c.l.b16 %v46
  %v350 = vunpack.c.l.b16 %v47
  %v351 = vunpack.c.l.b16 %v48
  %v352 = vunpack.c.l.b16 %v49
  %v353 = vunpack.c.l.b16 %v50
  %v354 = vunpack.c.l.b16 %v51
  %v355 = vunpack.c.l.b16 %v52
  %v356 = vunpack.c.l.b16 %v53
  %v357 = vunpack.c.l.b16 %v54
  %v358 = vunpack.c.l.b16 %v55
  %v359 = vunpack.c.l.b16 %v56
  %v360 = vunpack.c.l.b16 %v57
  %v361 = vunpack.c.l.b16 %v58
  %v362 = vunpack.c.l.b16 %v59
  %v363 = vunpack.c.l.b16 %v60
  %v364 = vunpack.c.l.b16 %v61
  %v365 = vunpack.c.l.b16 %v62
  %v366 = vunpack.c.l.b16 %v63
  %v367 = vunpack.c.l.b16 %v64
  %v368 = vunpack.c.l.b16 %v65
  %v369 = vunpack.c.l.b16 %v66
  %v370 = vunpack.c.l.b16 %v67
  %v371 = vunpack.c.l.b16 %v68
  %v372 = vunpack.c.l.b16 %v69
  %v373 = vunpack.c.l.b16 %v70
  %v374 = vunpack.c.l.b16 %v71
  %v375 = vunpack.c.l.b16 %v72
  %v376 = vunpack.c.l.b16 %v73
  %v377 = vunpack.c.l.b16 %v74
  %v378 = vunpack.c.l.b16 %v75
  %v379 = vunpack.c.l.b16 %v76
  %v380 = vunpack.c.l.b16 %v77
  %v381 = vunpack.c.l.b16 %v78
  %v382 = vunpack.c.l.b16 %v79
  %v383 = vunpack.c.l.b16 %v80
  %v384 = vunpack.c.l.b16 %v81
  %v385 = vunpack.c.l.b16 %v82
  %v386 = vunpack.c.l.b16 %v83
  %v387 = vunpack.c.l.b16 %v84
  %v388 = vunpack.c.l.b16 %v85
  %v389 = vunpack.c.l.b16 %v86
  %v390 = vunpack.c.l.b16 %v87
  %v391 = vunpack.c.l.b16 %v88
  %v392 = vunpack.c.l.b16 %v89
  %v393 = vunpack.c.l.b16 %v90
  %v394 = vunpack.c.l.b16 %v91
  %v395 = vunpack.c.l.b16 %v92
  %v396 = vunpack.c.l.b16 %v93
  %v397 = vunpack.c.l.b16 %v94
  %v398 = vunpack.c.l.b16 %v95
  %v399 = vunpack.c.l.b16 %v96
  %v400 = vunpack.c.l.b16 %v97
  %v401 = vunpack.c.l.b16 %v98
  %v402 = vunpack.c.l.b16 %v99
  %v403 = vunpack.c.l.b16 %v100
  %v404 = vunpack.c.l.b16 %v101
  %v405 = vunpack.c.l.b16 %v102
  %v406 = vunpack.c.l.b16 %v103
  %v407 = vunpack.c.l.b16 %v104
  %v408 = vunpack.c.l.b16 %v105
  %v409 = vunpack.c.l.b16 %v106
  %v410 = vunpack.c.l.b16 %v107
  %v411 = vunpack.c.l.b16 %v108
  %v412 = vunpack.c.l.b16 %v109
  %v413 = vunpack.c.l.b16 %v110
  %v414 = vunpack.c.l.b16 %v111
  %v415 = vunpack.c.l.b16 %v112
  %v416 = vunpack.c.l.b16 %v113
  %v417 = vunpack.c.l.b16 %v114
  %v418 = vunpack.c.l.b16 %v115
  %v419 = vunpack.c.l.b16 %v116
  %v420 = vunpack.c.l.b16 %v117
  %v421 = vunpack.c.l.b16 %v118
  %v422 = vunpack.c.l.b16 %v119
  %v423 = vunpack.c.l.b16 %v120
  %v424 = vunpack.c.l.b16 %v121
  %v425 = vunpack.c.l.b16 %v122
  %v426 = vunpack.c.l.b16 %v123
  %v427 = vunpack.c.l.b16 %v124
  %v428 = vunpack.c.l.b16 %v125
  %v429 = vunpack.c.l.b16 %v126
  %v430 = vunpack.c.l.b16 %v127
  %v431 = vunpack.c.l.b16 %v128
  %v432 = vunpack.c.l.b16 %v129
  %v433 = vunpack.c.l.b16 %v130
  %v434 = vunpack.c.l.b16 %v131
  %v435 = vunpack.c.l.b16 %v132
  %v436 = vunpack.c.l.b16 %v133
  %v437 = vunpack.c.l.b16 %v134
  %v438 = vunpack.c.l.b16 %v135
  %v439 = vunpack.c.l.b16 %v136
  %v440 = vunpack.c.l.b16 %v137
  %v441 = vunpack.c.l.b16 %v138
  %v442 = vunpack.c.l.b16 %v139
  %v443 = vunpack.c.l.b16 %v140
  %v444 = vunpack.c.l.b16 %v141
  %v445 = vunpack.c.l.b16 %v142
  %v446 = vunpack.c.l.b16 %v143
  %v447 = vunpack.c.l.b16 %v144
  %v448 = vunpack.c.l.b16 %v145
  %v449 = vunpack.c.l.b16 %v146
  %v450 = vunpack.c.l.b16 %v147
  %v451 = vunpack.c.l.b16 %v148
  %v452 = vpack.c.b16 %v341, %v340
  %v453 = vpack.c.b16 %v343, %v342
  %v454 = vpack.c.b16 %v345, %v344
  %v455 = vpack.c.b16 %v347, %v346
  %v456 = vpack.c.b16 %v349, %v348
  %v457 = vpack.c.b16 %v351, %v350
  %v458 = vpack.c.b16 %v353, %v352
  %v459 = vpack.c.b16 %v355, %v354
  %v460 = vpack.c.b16 %v357, %v356
  %v461 = vpack.c.b16 %v359, %v358
  %v462 = vpack.c.b16 %v361, %v360
  %v463 = vpack.c.b16 %v363, %v362
  %v464 = vpack.c.b16 %v365, %v364
  %v465 = vpack.c.b16 %v367, %v366
  %v466 = vpack.c.b16 %v369, %v368
  %v467 = vpack.c.b16 %v371, %v370
  %v468 = vpack.c.b16 %v373, %v372
  %v469 = vpack.c.b16 %v375, %v374
  %v470 = vpack.c.b16 %v377, %v376
  %v471 = vpack.c.b16 %v379, %v378
  %v472 = vpack.c.b16 %v381, %v380
  %v473 = vpack.c.b16 %v383, %v382
  %v474 = vpack.c.b16 %v385, %v384
  %v475 = vpack.c.b16 %v387, %v386
  %v476 = vpack.c.b16 %v389, %v388
  %v477 = vpack.c.b16 %v391, %v390
  %v478 = vpack.c.b16 %v393, %v392
  %v479 = vpack.c.b16 %v395, %v394
  %v480 = vpack.c.b16 %v397, %v396
  %v481 = vpack.c.b16 %v399, %v398
  %v482 = vpack.c.b16 %v401, %v400
  %v483 = vpack.c.b16 %v403, %v402
  %v484 = vpack.c.b16 %v405, %v404
  %v485 = vpack.c.b16 %v407, %v406
  %v486 = vpack.c.b16 %v409, %v408
  %v487 = vpack.c.b16 %v411, %v410
  %v488 = vpack.c.b16 %v413, %v412
  %v489 = vpack.c.b16 %v415, %v414
  %v490 = vpack.c.b16 %v417, %v416
  %v491 = vpack.c.b16 %v419, %v418
  %v492 = vpack.c.b16 %v421, %v420
  %v493 = vpack.c.b16 %v423, %v422
  %v494 = vpack.c.b16 %v425, %v424
  %v495 = vpack.c.b16 %v427, %v426
  %v496 = vpack.c.b16 %v429, %v428
  %v497 = vpack.c.b16 %v431, %v430
  %v498 = vpack.c.b16 %v433, %v432
  %v499 = vpack.c.b16 %v435, %v434
  %v500 = vpack.c.b16 %v437, %v436
  %v501 = vpack.c.b16 %v439, %v438
  %v502 = vpack.c.b16 %v441, %v440
  %v503 = vpack.c.b16 %v443, %v442
  %v504 = vpack.c.b16 %v445, %v444
  %v505 = vpack.c.b16 %v447, %v446
  %v506 = vpack.c.b16 %v449, %v448
  %v507 = vpack.c.b16 %v451, %v450
  %564 = vmatprep.subr.bf16.mxu0 0
  %565 = vmatpush1.bf16.msra.mxu0 %v459
  %566 = vmatprep.subr.bf16.mxu0 0
  %567 = vmatpush1.bf16.msra.mxu0 %v458
  %568 = vmatprep.subr.bf16.mxu0 0
  %569 = vmatpush1.bf16.msra.mxu0 %v457
  %570 = vmatprep.subr.bf16.mxu0 0
  %571 = vmatpush1.bf16.msra.mxu0 %v456
  %572 = vmatprep.subr.bf16.mxu0 0
  %573 = vmatpush1.bf16.msra.mxu0 %v455
  %574 = vmatprep.subr.bf16.mxu0 0
  %575 = vmatpush1.bf16.msra.mxu0 %v454
  %576 = vmatprep.subr.bf16.mxu0 0
  %577 = vmatpush1.bf16.msra.mxu0 %v453
  %578 = vmatprep.subr.bf16.mxu0 0
  %579 = vmatpush1.bf16.msra.mxu0 %v452
  %580 = vmatprep.subr.bf16.mxu0 0
  %581 = vmatpush2.bf16.msra.mxu0 %v467
  %582 = vmatprep.subr.bf16.mxu0 0
  %583 = vmatpush2.bf16.msra.mxu0 %v466
  %584 = vmatprep.subr.bf16.mxu0 0
  %585 = vmatpush2.bf16.msra.mxu0 %v465
  %586 = vmatprep.subr.bf16.mxu0 0
  %587 = vmatpush2.bf16.msra.mxu0 %v464
  %588 = vmatprep.subr.bf16.mxu0 0
  %589 = vmatpush2.bf16.msra.mxu0 %v463
  %590 = vmatprep.subr.bf16.mxu0 0
  %591 = vmatpush2.bf16.msra.mxu0 %v462
  %592 = vmatprep.subr.bf16.mxu0 0
  %593 = vmatpush2.bf16.msra.mxu0 %v461
  %594 = vmatprep.subr.bf16.mxu0 0
  %595 = vmatpush2.bf16.msra.mxu0 %v460
  %596 = vmatprep.mubr.bf16.mxu0 %v201
  %597 = vmatmul.mubr.bf16.gmra.mxu0 %v200
  %v598 = vpop.f32.mrf.mxu0
  %v599 = vadd.f32 %v154, %v598
  %v600 = vpop.f32.mrf.mxu0
  %v601 = vpop.f32.mrf.mxu0
  %v602 = vadd.f32 %v154, %v601
  %v603 = vpop.f32.mrf.mxu0
  %604 = vmatprep.mubr.bf16.mxu0 %v208
  %605 = vmatmul.mubr.bf16.gmra.mxu0 %v207
  %v606 = vpop.f32.mrf.mxu0
  %v607 = vadd.f32 %v154, %v606
  %v608 = vpop.f32.mrf.mxu0
  %v609 = vpop.f32.mrf.mxu0
  %v610 = vadd.f32 %v154, %v609
  %v611 = vpop.f32.mrf.mxu0
  %612 = vdwg.mxu0
  %613 = vmatprep.subr.bf16.mxu0 0
  %614 = vmatpush1.bf16.msra.mxu0 %v475
  %615 = vmatprep.subr.bf16.mxu0 0
  %616 = vmatpush1.bf16.msra.mxu0 %v474
  %617 = vmatprep.subr.bf16.mxu0 0
  %618 = vmatpush1.bf16.msra.mxu0 %v473
  %619 = vmatprep.subr.bf16.mxu0 0
  %620 = vmatpush1.bf16.msra.mxu0 %v472
  %621 = vmatprep.subr.bf16.mxu0 0
  %622 = vmatpush1.bf16.msra.mxu0 %v471
  %623 = vmatprep.subr.bf16.mxu0 0
  %624 = vmatpush1.bf16.msra.mxu0 %v470
  %625 = vmatprep.subr.bf16.mxu0 0
  %626 = vmatpush1.bf16.msra.mxu0 %v469
  %627 = vmatprep.subr.bf16.mxu0 0
  %628 = vmatpush1.bf16.msra.mxu0 %v468
  %629 = vmatprep.subr.bf16.mxu0 0
  %630 = vmatpush2.bf16.msra.mxu0 %v483
  %631 = vmatprep.subr.bf16.mxu0 0
  %632 = vmatpush2.bf16.msra.mxu0 %v482
  %633 = vmatprep.subr.bf16.mxu0 0
  %634 = vmatpush2.bf16.msra.mxu0 %v481
  %635 = vmatprep.subr.bf16.mxu0 0
  %636 = vmatpush2.bf16.msra.mxu0 %v480
  %637 = vmatprep.subr.bf16.mxu0 0
  %638 = vmatpush2.bf16.msra.mxu0 %v479
  %639 = vmatprep.subr.bf16.mxu0 0
  %640 = vmatpush2.bf16.msra.mxu0 %v478
  %641 = vmatprep.subr.bf16.mxu0 0
  %642 = vmatpush2.bf16.msra.mxu0 %v477
  %643 = vmatprep.subr.bf16.mxu0 0
  %644 = vmatpush2.bf16.msra.mxu0 %v476
  %645 = vmatprep.mubr.bf16.mxu0 %v203
  %646 = vmatmul.mubr.bf16.gmra.mxu0 %v202
  %v647 = vpop.f32.mrf.mxu0
  %v648 = vadd.f32 %v599, %v647
  %v649 = vpop.f32.mrf.mxu0
  %v650 = vpop.f32.mrf.mxu0
  %v651 = vadd.f32 %v602, %v650
  %v652 = vpop.f32.mrf.mxu0
  %653 = vmatprep.mubr.bf16.mxu0 %v210
  %654 = vmatmul.mubr.bf16.gmra.mxu0 %v209
  %v655 = vpop.f32.mrf.mxu0
  %v656 = vadd.f32 %v607, %v655
  %v657 = vpop.f32.mrf.mxu0
  %v658 = vpop.f32.mrf.mxu0
  %v659 = vadd.f32 %v610, %v658
  %v660 = vpop.f32.mrf.mxu0
  %661 = vdwg.mxu0
  %662 = vmatprep.subr.bf16.mxu0 0
  %663 = vmatpush1.bf16.msra.mxu0 %v491
  %664 = vmatprep.subr.bf16.mxu0 0
  %665 = vmatpush1.bf16.msra.mxu0 %v490
  %666 = vmatprep.subr.bf16.mxu0 0
  %667 = vmatpush1.bf16.msra.mxu0 %v489
  %668 = vmatprep.subr.bf16.mxu0 0
  %669 = vmatpush1.bf16.msra.mxu0 %v488
  %670 = vmatprep.subr.bf16.mxu0 0
  %671 = vmatpush1.bf16.msra.mxu0 %v487
  %672 = vmatprep.subr.bf16.mxu0 0
  %673 = vmatpush1.bf16.msra.mxu0 %v486
  %674 = vmatprep.subr.bf16.mxu0 0
  %675 = vmatpush1.bf16.msra.mxu0 %v485
  %676 = vmatprep.subr.bf16.mxu0 0
  %677 = vmatpush1.bf16.msra.mxu0 %v484
  %678 = vmatprep.subr.bf16.mxu0 0
  %679 = vmatpush2.bf16.msra.mxu0 %v499
  %680 = vmatprep.subr.bf16.mxu0 0
  %681 = vmatpush2.bf16.msra.mxu0 %v498
  %682 = vmatprep.subr.bf16.mxu0 0
  %683 = vmatpush2.bf16.msra.mxu0 %v497
  %684 = vmatprep.subr.bf16.mxu0 0
  %685 = vmatpush2.bf16.msra.mxu0 %v496
  %686 = vmatprep.subr.bf16.mxu0 0
  %687 = vmatpush2.bf16.msra.mxu0 %v495
  %688 = vmatprep.subr.bf16.mxu0 0
  %689 = vmatpush2.bf16.msra.mxu0 %v494
  %690 = vmatprep.subr.bf16.mxu0 0
  %691 = vmatpush2.bf16.msra.mxu0 %v493
  %692 = vmatprep.subr.bf16.mxu0 0
  %693 = vmatpush2.bf16.msra.mxu0 %v492
  %694 = vmatprep.mubr.bf16.mxu0 %v205
  %695 = vmatmul.mubr.bf16.gmra.mxu0 %v204
  %v696 = vpop.f32.mrf.mxu0
  %v697 = vadd.f32 %v648, %v696
  %v698 = vpop.f32.mrf.mxu0
  %v699 = vpop.f32.mrf.mxu0
  %v700 = vadd.f32 %v651, %v699
  %v701 = vpop.f32.mrf.mxu0
  %702 = vmatprep.mubr.bf16.mxu0 %v212
  %703 = vmatmul.mubr.bf16.gmra.mxu0 %v211
  %v704 = vpop.f32.mrf.mxu0
  %v705 = vadd.f32 %v656, %v704
  %v706 = vpop.f32.mrf.mxu0
  %v707 = vpop.f32.mrf.mxu0
  %v708 = vadd.f32 %v659, %v707
  %v709 = vpop.f32.mrf.mxu0
  %710 = vdwg.mxu0
  %711 = vmatprep.subr.bf16.mxu0 0
  %712 = vmatpush1.bf16.msra.mxu0 %v507
  %713 = vmatprep.subr.bf16.mxu0 0
  %714 = vmatpush1.bf16.msra.mxu0 %v506
  %715 = vmatprep.subr.bf16.mxu0 0
  %716 = vmatpush1.bf16.msra.mxu0 %v505
  %717 = vmatprep.subr.bf16.mxu0 0
  %718 = vmatpush1.bf16.msra.mxu0 %v504
  %719 = vmatprep.subr.bf16.mxu0 0
  %720 = vmatpush1.bf16.msra.mxu0 %v503
  %721 = vmatprep.subr.bf16.mxu0 0
  %722 = vmatpush1.bf16.msra.mxu0 %v502
  %723 = vmatprep.subr.bf16.mxu0 0
  %724 = vmatpush1.bf16.msra.mxu0 %v501
  %725 = vmatprep.subr.bf16.mxu0 0
  %726 = vmatpush1.bf16.msra.mxu0 %v500
  %727 = vmatprep.subr.bf16.mxu0 0
  %728 = vmatpush2.bf16.msra.mxu0 0
  %729 = vmatprep.subr.bf16.mxu0 0
  %730 = vmatpush2.bf16.msra.mxu0 0
  %731 = vmatprep.subr.bf16.mxu0 0
  %732 = vmatpush2.bf16.msra.mxu0 0
  %733 = vmatprep.subr.bf16.mxu0 0
  %734 = vmatpush2.bf16.msra.mxu0 0
  %735 = vmatprep.subr.bf16.mxu0 0
  %736 = vmatpush2.bf16.msra.mxu0 0
  %737 = vmatprep.subr.bf16.mxu0 0
  %738 = vmatpush2.bf16.msra.mxu0 0
  %739 = vmatprep.subr.bf16.mxu0 0
  %740 = vmatpush2.bf16.msra.mxu0 0
  %741 = vmatprep.subr.bf16.mxu0 0
  %742 = vmatpush2.bf16.msra.mxu0 0
  %743 = vmatprep.mubr.bf16.mxu0 0
  %744 = vmatmul.mubr.bf16.gmra.mxu0 %v206
  %v745 = vpop.f32.mrf.mxu0
  %v746 = vadd.f32 %v697, %v745
  %v747 = vpop.f32.mrf.mxu0
  %v748 = vpop.f32.mrf.mxu0
  %v749 = vadd.f32 %v700, %v748
  %v750 = vpop.f32.mrf.mxu0
  %751 = vmatprep.mubr.bf16.mxu0 0
  %752 = vmatmul.mubr.bf16.gmra.mxu0 %v213
  %v753 = vpop.f32.mrf.mxu0
  %v754 = vadd.f32 %v705, %v753
  %v755 = vpop.f32.mrf.mxu0
  %v756 = vpop.f32.mrf.mxu0
  %v757 = vadd.f32 %v708, %v756
  %v758 = vpop.f32.mrf.mxu0
  %759 = vdwg.mxu0
  %v760 = vmax.f32 %v746, 0.0
  %v761 = vmax.f32 %v749, 0.0
  %v762 = vmax.f32 %v754, 0.0
  %v763 = vmax.f32 %v757, 0.0
  %v764 = vpack.c.bf16 %v761, %v760
  %v765 = vpack.c.bf16 %v763, %v762
  %v766 = vld [vmem:[%s3] sm:$0xf]
  %v767 = vld [vmem:[%s3 + $0x4] sm:$0xf]
  %v768 = vld [vmem:[%s3 + $0x8] sm:$0xf]
  %v769 = vld [vmem:[%s3 + $0xc] sm:$0xf]
  %v770 = vld [vmem:[%s3 + $0x10] sm:$0xf]
  %v771 = vld [vmem:[%s3 + $0x14] sm:$0xf]
  %v772 = vld [vmem:[%s3 + $0x18] sm:$0xf]
  %v773 = vld [vmem:[%s3 + $0x1c] sm:$0xf]
  %v774 = vld [vmem:[%s3 + $0x20] sm:$0xf]
  %v775 = vld [vmem:[%s3 + $0x24] sm:$0xf]
  %v776 = vld [vmem:[%s3 + $0x28] sm:$0xf]
  %v777 = vld [vmem:[%s3 + $0x2c] sm:$0xf]
  %v778 = vld [vmem:[%s3 + $0x30] sm:$0xf]
  %v779 = vld [vmem:[%s3 + $0x34] sm:$0xf]
  %v780 = vld [vmem:[%s3 + $0x38] sm:$0xf]
  %v781 = vld [vmem:[%s3 + $0x3c] sm:$0xf]
  %v782 = vld [vmem:[%s4] sm:$0x1]
  %v784 = vlaneseq
  %v785 = vshrl.u32 %v784, 7
  %v786 = vsub.s32 0, %v785
  %v787 = vrot.slane %v782, %v786
  %v805 = vunpack.c.l.b16 %v766
  %v806 = vunpack.c.l.b16 %v767
  %v807 = vunpack.c.l.b16 %v768
  %v808 = vunpack.c.l.b16 %v769
  %v809 = vunpack.c.l.b16 %v770
  %v810 = vunpack.c.l.b16 %v771
  %v811 = vunpack.c.l.b16 %v772
  %v812 = vunpack.c.l.b16 %v773
  %v813 = vunpack.c.l.b16 %v774
  %v814 = vunpack.c.l.b16 %v775
  %v815 = vunpack.c.l.b16 %v776
  %v816 = vunpack.c.l.b16 %v777
  %v817 = vunpack.c.l.b16 %v778
  %v818 = vunpack.c.l.b16 %v779
  %v819 = vunpack.c.l.b16 %v780
  %v820 = vunpack.c.l.b16 %v781
  %v821 = vpack.c.b16 %v806, %v805
  %v822 = vpack.c.b16 %v808, %v807
  %v823 = vpack.c.b16 %v810, %v809
  %v824 = vpack.c.b16 %v812, %v811
  %v825 = vpack.c.b16 %v814, %v813
  %v826 = vpack.c.b16 %v816, %v815
  %v827 = vpack.c.b16 %v818, %v817
  %v828 = vpack.c.b16 %v820, %v819
  %837 = vmatprep.subr.bf16.mxu0 0
  %838 = vmatpush1.bf16.msra.mxu0 %v828
  %839 = vmatprep.subr.bf16.mxu0 0
  %840 = vmatpush1.bf16.msra.mxu0 %v827
  %841 = vmatprep.subr.bf16.mxu0 0
  %842 = vmatpush1.bf16.msra.mxu0 %v826
  %843 = vmatprep.subr.bf16.mxu0 0
  %844 = vmatpush1.bf16.msra.mxu0 %v825
  %845 = vmatprep.subr.bf16.mxu0 0
  %846 = vmatpush1.bf16.msra.mxu0 %v824
  %847 = vmatprep.subr.bf16.mxu0 0
  %848 = vmatpush1.bf16.msra.mxu0 %v823
  %849 = vmatprep.subr.bf16.mxu0 0
  %850 = vmatpush1.bf16.msra.mxu0 %v822
  %851 = vmatprep.subr.bf16.mxu0 0
  %852 = vmatpush1.bf16.msra.mxu0 %v821
  %853 = vmatprep.subr.bf16.mxu0 0
  %854 = vmatpush2.bf16.msra.mxu0 0
  %855 = vmatprep.subr.bf16.mxu0 0
  %856 = vmatpush2.bf16.msra.mxu0 0
  %857 = vmatprep.subr.bf16.mxu0 0
  %858 = vmatpush2.bf16.msra.mxu0 0
  %859 = vmatprep.subr.bf16.mxu0 0
  %860 = vmatpush2.bf16.msra.mxu0 0
  %861 = vmatprep.subr.bf16.mxu0 0
  %862 = vmatpush2.bf16.msra.mxu0 0
  %863 = vmatprep.subr.bf16.mxu0 0
  %864 = vmatpush2.bf16.msra.mxu0 0
  %865 = vmatprep.subr.bf16.mxu0 0
  %866 = vmatpush2.bf16.msra.mxu0 0
  %867 = vmatprep.subr.bf16.mxu0 0
  %868 = vmatpush2.bf16.msra.mxu0 0
  %869 = vmatprep.mubr.bf16.mxu0 0
  %870 = vmatmul.mubr.bf16.gmra.mxu0 %v764
  %v871 = vpop.f32.mrf.mxu0
  %v872 = vadd.f32 %v787, %v871
  %v873 = vpop.f32.mrf.mxu0
  %v874 = vpop.f32.mrf.mxu0
  %v875 = vadd.f32 %v787, %v874
  %v876 = vpop.f32.mrf.mxu0
  %877 = vmatprep.mubr.bf16.mxu0 0
  %878 = vmatmul.mubr.bf16.gmra.mxu0 %v765
  %v879 = vpop.f32.mrf.mxu0
  %v880 = vadd.f32 %v787, %v879
  %v881 = vpop.f32.mrf.mxu0
  %v882 = vpop.f32.mrf.mxu0
  %v883 = vadd.f32 %v787, %v882
  %v884 = vpop.f32.mrf.mxu0
  %885 = vdwg.mxu0
  %886 = vst [vmem:[%s5] sm:$0xff] %v872
  %887 = vst [vmem:[%s5 + $0x8] sm:$0xff] %v875
  %888 = vst [vmem:[%s5 + $0x10] sm:$0xff] %v880
  %889 = vst [vmem:[%s5 + $0x18] sm:$0xff] %v883
  // Predicated region
  $region22: #{net_relu_forward.1} parent=0 // pred_check
    _
  $region23: #{net_relu_forward.1} parent=0 // pred_check_branch
    %891 = sbr.rel (0) target = $region25
  $region24: #{net_relu_forward.1} parent=0 // pred_region
    _
  $region25: #{net_relu_forward.1} parent=0 // pred_fallthru
    _
  // Predicated region
  $region26: #{net_relu_forward.1} parent=0 // pred_check
    _
  $region27: #{net_relu_forward.1} parent=0 // pred_check_branch
    %893 = sbr.rel (0) target = $region29
  $region28: #{net_relu_forward.1} parent=0 // pred_region
    _
  $region29: #{net_relu_forward.1} parent=0 // pred_fallthru
    _

</llo_original>
